<compile_context>
chip_gen: v7x
topology: tpu7x:2x2x1
jax: 0.10.0
libtpu: 0.0.40
codegen_flags: <defaults>
</compile_context>

<pallas_src>
import functools

import jax
import jax.numpy as jnp
from jax import lax
from jax.experimental import pallas as pl
from jax.experimental.pallas import tpu as pltpu


def _tcn_fused_kernel(x_ref, w_ref, b_ref, y_ref, cache_ref, *,
                      kernel_size, dilations, compute_dtype):
    """Whole TCN stack for one batch block.

    x_ref     : (BB, T, D)      layer-0 input
    w_ref     : (L, K, D, D)    per-layer, per-tap weight slices (C_in, C_out)
    b_ref     : (L, 1, D)       per-layer bias (f32)
    y_ref     : (BB, T, D)      final activation
    cache_ref : (BB, C, D)      per-layer caches stacked along axis 1 (time-major)
    """
    BB, T, D = x_ref.shape
    K = kernel_size
    M = BB * T

    # Activation stays resident on-chip for the whole stack, flattened to (M, D)
    # so the batch folds into the matmul M dimension (leading-dim merge, minor dim
    # unchanged -> layout-trivial reshape).
    x = x_ref[...].reshape(M, D).astype(jnp.float32)

    # Per-batch-local time index of every sublane row (causal masking of rolls).
    row_t = lax.broadcasted_iota(jnp.int32, (M, D), 0) % T

    cache_pieces = [[] for _ in range(BB)]

    for i, dil in enumerate(dilations):                     # static unroll over layers
        P = (K - 1) * dil

        # cache_i = last P steps of the left-zero-padded layer input (time-major).
        # Pieces are carried in registers; the store happens once, after the loop.
        for b in range(BB):
            if P <= T:
                cache_pieces[b].append(x[b * T + T - P:b * T + T, :])
            else:
                cache_pieces[b].append(jnp.concatenate(
                    [jnp.zeros((P - T, D), jnp.float32), x[b * T:b * T + T, :]],
                    axis=0))

        # Dilated causal conv = sum over K taps of (M, D) @ (D, D) on the MXU.
        conv = None
        for k in range(K):
            s = (K - 1 - k) * dil       # tap k reads x[t - s]; zeros flow in for t < s
            if s > 0 and s >= T:
                continue                # identically-zero tap: prune roll + matmul
            if s == 0:
                tap = x
            else:
                # One whole-block sublane roll (XLU) + causal mask.  The wrapped rows
                # (which would otherwise read the previous batch element) are exactly
                # the masked ones, so correctness is preserved.
                tap = jnp.where(row_t < s, 0.0, pltpu.roll(x, shift=s, axis=0))
            part = jnp.dot(tap.astype(compute_dtype), w_ref[i, k],
                           preferred_element_type=jnp.float32)
            conv = part if conv is None else conv + part

        conv = conv + b_ref[i]                              # bias add, f32 VPU
        x = jnp.maximum(conv, 0.0) + x                      # ReLU + residual
        # TODO(synk): training-mode dropout (p=0.1) not replicated (eval semantics).

    # Single consolidated stores (no per-layer masked sub-tile stores).
    y_ref[...] = x.reshape(BB, T, D).astype(y_ref.dtype)
    cache_ref[...] = jnp.stack(
        [jnp.concatenate(cache_pieces[b], axis=0) for b in range(BB)],
        axis=0).astype(cache_ref.dtype)


def tcn_forward(x, weights, biases, *, kernel_size, batch_block=None,
                compute_dtype=jnp.float32):
    """x: (B, T, D) float32.  Returns (y (B, T, D), new_cache (B, D, sum_i P_i))."""
    B, T, D = x.shape
    L = len(weights)
    K = kernel_size
    dilations = tuple(2 ** i for i in range(L))
    paddings = tuple((K - 1) * d for d in dilations)
    C = sum(paddings)

    itemsize = jnp.dtype(compute_dtype).itemsize

    def vmem_estimate(bb):
        x_blk = bb * T * D * 4
        cache_blk = bb * C * D * 4
        w_bytes = L * K * D * D * itemsize
        b_bytes = L * D * 4
        pipeline = 2 * (2 * x_blk + cache_blk + w_bytes + b_bytes)   # double-buffered blocks
        working = (3 + K) * bb * T * D * 4 + cache_blk               # resident x, taps, acc, cache
        return pipeline + working

    if batch_block is None:
        # Default: fold the whole batch into ONE grid step (bigger matmul M, no
        # per-step pipeline overhead / weight re-priming).  Split 2-way only when the
        # per-core work is large enough to pay for the extra step (v7x megacore).
        batch_block = B
        if B % 2 == 0 and (B // 2) * T * D >= (1 << 16):
            batch_block = B // 2
        # VMEM clamp (v7x: 64 MiB physical, 32 MiB scoped default).
        while batch_block > 1 and vmem_estimate(batch_block) > (24 << 20):
            nxt = batch_block // 2
            while nxt > 1 and B % nxt != 0:
                nxt -= 1
            batch_block = max(nxt, 1)
    assert B % batch_block == 0
    BB = batch_block

    est = vmem_estimate(BB)
    vmem_limit = None
    if est > (12 << 20):          # raise scoped VMEM (v5e default is only 16 MiB)
        vmem_limit = min(2 * est, 100 << 20)

    # Conv weights (C_out, C_in, K) -> per-tap matmul slices (L, K, C_in, C_out).
    w_stack = jnp.stack(
        [jnp.transpose(w, (2, 1, 0)) for w in weights]).astype(compute_dtype)
    b_stack = jnp.stack([b.reshape(1, D) for b in biases]).astype(jnp.float32)

    kernel = functools.partial(
        _tcn_fused_kernel, kernel_size=K, dilations=dilations,
        compute_dtype=compute_dtype)

    y, cache_tmd = pl.pallas_call(
        kernel,
        out_shape=(jax.ShapeDtypeStruct((B, T, D), x.dtype),
                   jax.ShapeDtypeStruct((B, C, D), x.dtype)),
        grid_spec=pltpu.PrefetchScalarGridSpec(
            num_scalar_prefetch=0,
            grid=(B // BB,),
            in_specs=[
                pl.BlockSpec((BB, T, D), lambda b: (b, 0, 0)),
                pl.BlockSpec((L, K, D, D), lambda b: (0, 0, 0, 0)),
                pl.BlockSpec((L, 1, D), lambda b: (0, 0, 0)),
            ],
            out_specs=(
                pl.BlockSpec((BB, T, D), lambda b: (b, 0, 0)),
                pl.BlockSpec((BB, C, D), lambda b: (b, 0, 0)),
            ),
        ),
        compiler_params=pltpu.CompilerParams(
            dimension_semantics=("parallel",),
            vmem_limit_bytes=vmem_limit),
    )(x, w_stack, b_stack)

    # PyTorch cache layout is (B, D, C); single tiny transpose of the time-major output.
    new_cache = jnp.transpose(cache_tmd, (0, 2, 1))
    return y, new_cache


def tcn_reference(x, weights, biases, *, kernel_size):
    """Pure-JAX (f32) reference mirroring the PyTorch module (eval mode)."""
    y = jnp.transpose(x, (0, 2, 1))  # (B, D, T)
    caches = []
    for i, (w, b) in enumerate(zip(weights, biases)):
        dilation = 2 ** i
        P = (kernel_size - 1) * dilation
        yp = jnp.pad(y, ((0, 0), (0, 0), (P, 0)))
        caches.append(yp[:, :, -P:])
        conv = lax.conv_general_dilated(
            yp, w, window_strides=(1,), padding="VALID",
            rhs_dilation=(dilation,),
            dimension_numbers=("NCH", "OIH", "NCH")) + b[None, :, None]
        y = jnp.maximum(conv, 0.0) + y
    return jnp.transpose(y, (0, 2, 1)), jnp.concatenate(caches, axis=2)


def init_params(key, num_layers, channel, kernel_size):
    weights, biases = [], []
    bound = 1.0 / (channel * kernel_size) ** 0.5  # PyTorch Conv1d default scale
    for _ in range(num_layers):
        kw, kb, key = jax.random.split(key, 3)
        weights.append(jax.random.uniform(
            kw, (channel, channel, kernel_size), jnp.float32, -bound, bound))
        biases.append(jax.random.uniform(
            kb, (channel,), jnp.float32, -bound, bound))
    return weights, biases


if __name__ == "__main__":
    NUM_LAYERS = 3
    CHANNEL = 32     # D (32 < 128 lanes; lane under-utilization is inherent to D=32)
    KERNEL_SIZE = 3
    B, T = 2, 16

    key = jax.random.PRNGKey(0)
    kx, kp = jax.random.split(key)
    x = jax.random.normal(kx, (B, T, CHANNEL), jnp.float32)
    weights, biases = init_params(kp, NUM_LAYERS, CHANNEL, KERNEL_SIZE)

    fwd = jax.jit(functools.partial(tcn_forward, kernel_size=KERNEL_SIZE))
    y, cache = fwd(x, weights, biases)
    jax.block_until_ready((y, cache))

    y_exp, cache_exp = tcn_reference(x, weights, biases, kernel_size=KERNEL_SIZE)
    total_pad = sum((KERNEL_SIZE - 1) * 2 ** i for i in range(NUM_LAYERS))
    assert y.shape == (B, T, CHANNEL)
    assert cache.shape == (B, CHANNEL, total_pad)
    # f32 MXU path now -> tight tolerance (only accumulation-order differences remain).
    assert jnp.allclose(y, y_exp, rtol=1e-4, atol=1e-4)
    assert jnp.allclose(cache, cache_exp, rtol=1e-4, atol=1e-4)
    print("KERNEL_OK")
</pallas_src>

<mosaic_0001>
module attributes {stable_mosaic.version = 11 : i64} {
  func.func @_tcn_fused_kernel(%arg0: i32, %arg1: memref<2x16x32xf32, #tpu.memory_space<vmem>>, %arg2: memref<3x3x32x32xf32, #tpu.memory_space<vmem>>, %arg3: memref<3x1x32xf32, #tpu.memory_space<vmem>>, %arg4: memref<2x16x32xf32, #tpu.memory_space<vmem>>, %arg5: memref<2x14x32xf32, #tpu.memory_space<vmem>>) attributes {dimension_semantics = [#tpu.dimension_semantics<parallel>], iteration_bounds = array<i64: 1>, scalar_prefetch = 0 : i64, scratch_operands = 0 : i64, tpu.core_type = #tpu.core_type<tc>, window_params = [{transform_indices = @transform_0, window_bounds = array<i64: 2, 16, 32>}, {pipeline_mode = #tpu.pipeline_mode<synchronous>, transform_indices = @transform_1, window_bounds = array<i64: 3, 3, 32, 32>}, {pipeline_mode = #tpu.pipeline_mode<synchronous>, transform_indices = @transform_2, window_bounds = array<i64: 3, 1, 32>}, {transform_indices = @transform_3, window_bounds = array<i64: 2, 16, 32>}, {transform_indices = @transform_4, window_bounds = array<i64: 2, 14, 32>}]} {
    %c0 = arith.constant 0 : index
    %c0_0 = arith.constant 0 : index
    %c0_1 = arith.constant 0 : index
    %0 = vector.load %arg1[%c0, %c0_0, %c0_1] : memref<2x16x32xf32, #tpu.memory_space<vmem>>, vector<2x16x32xf32>
    %1 = vector.shape_cast %0 : vector<2x16x32xf32> to vector<32x32xf32>
    %2 = tpu.iota {dimensions = array<i32: 0>} : vector<32x32xi32>
    %c16_i32 = arith.constant 16 : i32
    %c0_i32 = arith.constant 0 : i32
    %3 = arith.cmpi eq, %c16_i32, %c0_i32 : i32
    %c1_i32 = arith.constant 1 : i32
    %4 = arith.select %3, %c1_i32, %c16_i32 : i32
    %5 = vector.broadcast %4 : i32 to vector<32x32xi32>
    %6 = arith.remsi %2, %5 : vector<32x32xi32>
    %c0_i32_2 = arith.constant 0 : i32
    %7 = vector.broadcast %c0_i32_2 : i32 to vector<32x32xi32>
    %8 = arith.cmpi ne, %6, %7 : vector<32x32xi32>
    %c0_i32_3 = arith.constant 0 : i32
    %9 = vector.broadcast %c0_i32_3 : i32 to vector<32x32xi32>
    %10 = arith.cmpi slt, %6, %9 : vector<32x32xi32>
    %c0_i32_4 = arith.constant 0 : i32
    %11 = arith.cmpi slt, %4, %c0_i32_4 : i32
    %12 = vector.broadcast %11 : i1 to vector<32x32xi1>
    %13 = vector.broadcast %12 : vector<32x32xi1> to vector<32x32xi1>
    %14 = arith.xori %10, %13 : vector<32x32xi1>
    %15 = arith.andi %14, %8 : vector<32x32xi1>
    %16 = vector.broadcast %4 : i32 to vector<32x32xi32>
    %17 = arith.addi %6, %16 : vector<32x32xi32>
    %18 = arith.select %15, %17, %6 : vector<32x32xi1>, vector<32x32xi32>
    %19 = vector.extract_strided_slice %1 {offsets = [14, 0], sizes = [2, 32], strides = [1, 1]} : vector<32x32xf32> to vector<2x32xf32>
    %20 = vector.extract_strided_slice %1 {offsets = [30, 0], sizes = [2, 32], strides = [1, 1]} : vector<32x32xf32> to vector<2x32xf32>
    %c2_i32 = arith.constant 2 : i32
    %21 = vector.broadcast %c2_i32 : i32 to vector<32x32xi32>
    %22 = arith.cmpi slt, %18, %21 : vector<32x32xi32>
    %c2_i32_5 = arith.constant 2 : i32
    %23 = tpu.dynamic_rotate %1 by %c2_i32_5 dim 0 : vector<32x32xf32>, i32 -> vector<32x32xf32>
    %cst = arith.constant 0.000000e+00 : f32
    %24 = vector.broadcast %cst : f32 to vector<32x32xf32>
    %25 = arith.select %22, %24, %23 : vector<32x32xi1>, vector<32x32xf32>
    %c0_6 = arith.constant 0 : index
    %c0_7 = arith.constant 0 : index
    %c0_8 = arith.constant 0 : index
    %c0_9 = arith.constant 0 : index
    %26 = vector.load %arg2[%c0_6, %c0_7, %c0_8, %c0_9] : memref<3x3x32x32xf32, #tpu.memory_space<vmem>>, vector<1x1x32x32xf32>
    %27 = vector.shape_cast %26 : vector<1x1x32x32xf32> to vector<32x32xf32>
    %cst_10 = arith.constant dense<0.000000e+00> : vector<32x32xf32>
    %28 = tpu.matmul %25, %27, %cst_10 {dimension_numbers = #tpu.dot_dimension_numbers<[1], [0], [0], [1], [0, 0, 1, 1], [], []>} : vector<32x32xf32>, vector<32x32xf32>, vector<32x32xf32> -> vector<32x32xf32>
    %c1_i32_11 = arith.constant 1 : i32
    %29 = vector.broadcast %c1_i32_11 : i32 to vector<32x32xi32>
    %30 = arith.cmpi slt, %18, %29 : vector<32x32xi32>
    %c1_i32_12 = arith.constant 1 : i32
    %31 = tpu.dynamic_rotate %1 by %c1_i32_12 dim 0 : vector<32x32xf32>, i32 -> vector<32x32xf32>
    %cst_13 = arith.constant 0.000000e+00 : f32
    %32 = vector.broadcast %cst_13 : f32 to vector<32x32xf32>
    %33 = arith.select %30, %32, %31 : vector<32x32xi1>, vector<32x32xf32>
    %c0_14 = arith.constant 0 : index
    %c1 = arith.constant 1 : index
    %c0_15 = arith.constant 0 : index
    %c0_16 = arith.constant 0 : index
    %34 = vector.load %arg2[%c0_14, %c1, %c0_15, %c0_16] : memref<3x3x32x32xf32, #tpu.memory_space<vmem>>, vector<1x1x32x32xf32>
    %35 = vector.shape_cast %34 : vector<1x1x32x32xf32> to vector<32x32xf32>
    %cst_17 = arith.constant dense<0.000000e+00> : vector<32x32xf32>
    %36 = tpu.matmul %33, %35, %cst_17 {dimension_numbers = #tpu.dot_dimension_numbers<[1], [0], [0], [1], [0, 0, 1, 1], [], []>} : vector<32x32xf32>, vector<32x32xf32>, vector<32x32xf32> -> vector<32x32xf32>
    %37 = arith.addf %28, %36 : vector<32x32xf32>
    %c0_18 = arith.constant 0 : index
    %c2 = arith.constant 2 : index
    %c0_19 = arith.constant 0 : index
    %c0_20 = arith.constant 0 : index
    %38 = vector.load %arg2[%c0_18, %c2, %c0_19, %c0_20] : memref<3x3x32x32xf32, #tpu.memory_space<vmem>>, vector<1x1x32x32xf32>
    %39 = vector.shape_cast %38 : vector<1x1x32x32xf32> to vector<32x32xf32>
    %cst_21 = arith.constant dense<0.000000e+00> : vector<32x32xf32>
    %40 = tpu.matmul %1, %39, %cst_21 {dimension_numbers = #tpu.dot_dimension_numbers<[1], [0], [0], [1], [0, 0, 1, 1], [], []>} : vector<32x32xf32>, vector<32x32xf32>, vector<32x32xf32> -> vector<32x32xf32>
    %41 = arith.addf %37, %40 : vector<32x32xf32>
    %c0_22 = arith.constant 0 : index
    %c0_23 = arith.constant 0 : index
    %c0_24 = arith.constant 0 : index
    %42 = vector.load %arg3[%c0_22, %c0_23, %c0_24] : memref<3x1x32xf32, #tpu.memory_space<vmem>>, vector<1x1x32xf32>
    %43 = vector.shape_cast %42 : vector<1x1x32xf32> to vector<1x32xf32>
    %44 = vector.broadcast %43 : vector<1x32xf32> to vector<32x32xf32>
    %45 = arith.addf %41, %44 : vector<32x32xf32>
    %cst_25 = arith.constant 0.000000e+00 : f32
    %46 = vector.broadcast %cst_25 : f32 to vector<32x32xf32>
    %47 = arith.maximumf %45, %46 : vector<32x32xf32>
    %48 = arith.addf %47, %1 : vector<32x32xf32>
    %49 = vector.extract_strided_slice %48 {offsets = [12, 0], sizes = [4, 32], strides = [1, 1]} : vector<32x32xf32> to vector<4x32xf32>
    %50 = vector.extract_strided_slice %48 {offsets = [28, 0], sizes = [4, 32], strides = [1, 1]} : vector<32x32xf32> to vector<4x32xf32>
    %c4_i32 = arith.constant 4 : i32
    %51 = vector.broadcast %c4_i32 : i32 to vector<32x32xi32>
    %52 = arith.cmpi slt, %18, %51 : vector<32x32xi32>
    %c4_i32_26 = arith.constant 4 : i32
    %53 = tpu.dynamic_rotate %48 by %c4_i32_26 dim 0 : vector<32x32xf32>, i32 -> vector<32x32xf32>
    %cst_27 = arith.constant 0.000000e+00 : f32
    %54 = vector.broadcast %cst_27 : f32 to vector<32x32xf32>
    %55 = arith.select %52, %54, %53 : vector<32x32xi1>, vector<32x32xf32>
    %c1_28 = arith.constant 1 : index
    %c0_29 = arith.constant 0 : index
    %c0_30 = arith.constant 0 : index
    %c0_31 = arith.constant 0 : index
    %56 = vector.load %arg2[%c1_28, %c0_29, %c0_30, %c0_31] : memref<3x3x32x32xf32, #tpu.memory_space<vmem>>, vector<1x1x32x32xf32>
    %57 = vector.shape_cast %56 : vector<1x1x32x32xf32> to vector<32x32xf32>
    %cst_32 = arith.constant dense<0.000000e+00> : vector<32x32xf32>
    %58 = tpu.matmul %55, %57, %cst_32 {dimension_numbers = #tpu.dot_dimension_numbers<[1], [0], [0], [1], [0, 0, 1, 1], [], []>} : vector<32x32xf32>, vector<32x32xf32>, vector<32x32xf32> -> vector<32x32xf32>
    %c2_i32_33 = arith.constant 2 : i32
    %59 = vector.broadcast %c2_i32_33 : i32 to vector<32x32xi32>
    %60 = arith.cmpi slt, %18, %59 : vector<32x32xi32>
    %c2_i32_34 = arith.constant 2 : i32
    %61 = tpu.dynamic_rotate %48 by %c2_i32_34 dim 0 : vector<32x32xf32>, i32 -> vector<32x32xf32>
    %cst_35 = arith.constant 0.000000e+00 : f32
    %62 = vector.broadcast %cst_35 : f32 to vector<32x32xf32>
    %63 = arith.select %60, %62, %61 : vector<32x32xi1>, vector<32x32xf32>
    %c1_36 = arith.constant 1 : index
    %c1_37 = arith.constant 1 : index
    %c0_38 = arith.constant 0 : index
    %c0_39 = arith.constant 0 : index
    %64 = vector.load %arg2[%c1_36, %c1_37, %c0_38, %c0_39] : memref<3x3x32x32xf32, #tpu.memory_space<vmem>>, vector<1x1x32x32xf32>
    %65 = vector.shape_cast %64 : vector<1x1x32x32xf32> to vector<32x32xf32>
    %cst_40 = arith.constant dense<0.000000e+00> : vector<32x32xf32>
    %66 = tpu.matmul %63, %65, %cst_40 {dimension_numbers = #tpu.dot_dimension_numbers<[1], [0], [0], [1], [0, 0, 1, 1], [], []>} : vector<32x32xf32>, vector<32x32xf32>, vector<32x32xf32> -> vector<32x32xf32>
    %67 = arith.addf %58, %66 : vector<32x32xf32>
    %c1_41 = arith.constant 1 : index
    %c2_42 = arith.constant 2 : index
    %c0_43 = arith.constant 0 : index
    %c0_44 = arith.constant 0 : index
    %68 = vector.load %arg2[%c1_41, %c2_42, %c0_43, %c0_44] : memref<3x3x32x32xf32, #tpu.memory_space<vmem>>, vector<1x1x32x32xf32>
    %69 = vector.shape_cast %68 : vector<1x1x32x32xf32> to vector<32x32xf32>
    %cst_45 = arith.constant dense<0.000000e+00> : vector<32x32xf32>
    %70 = tpu.matmul %48, %69, %cst_45 {dimension_numbers = #tpu.dot_dimension_numbers<[1], [0], [0], [1], [0, 0, 1, 1], [], []>} : vector<32x32xf32>, vector<32x32xf32>, vector<32x32xf32> -> vector<32x32xf32>
    %71 = arith.addf %67, %70 : vector<32x32xf32>
    %c1_46 = arith.constant 1 : index
    %c0_47 = arith.constant 0 : index
    %c0_48 = arith.constant 0 : index
    %72 = vector.load %arg3[%c1_46, %c0_47, %c0_48] : memref<3x1x32xf32, #tpu.memory_space<vmem>>, vector<1x1x32xf32>
    %73 = vector.shape_cast %72 : vector<1x1x32xf32> to vector<1x32xf32>
    %74 = vector.broadcast %73 : vector<1x32xf32> to vector<32x32xf32>
    %75 = arith.addf %71, %74 : vector<32x32xf32>
    %cst_49 = arith.constant 0.000000e+00 : f32
    %76 = vector.broadcast %cst_49 : f32 to vector<32x32xf32>
    %77 = arith.maximumf %75, %76 : vector<32x32xf32>
    %78 = arith.addf %77, %48 : vector<32x32xf32>
    %79 = vector.extract_strided_slice %78 {offsets = [8, 0], sizes = [8, 32], strides = [1, 1]} : vector<32x32xf32> to vector<8x32xf32>
    %80 = vector.extract_strided_slice %78 {offsets = [24, 0], sizes = [8, 32], strides = [1, 1]} : vector<32x32xf32> to vector<8x32xf32>
    %c8_i32 = arith.constant 8 : i32
    %81 = vector.broadcast %c8_i32 : i32 to vector<32x32xi32>
    %82 = arith.cmpi slt, %18, %81 : vector<32x32xi32>
    %c8_i32_50 = arith.constant 8 : i32
    %83 = tpu.dynamic_rotate %78 by %c8_i32_50 dim 0 : vector<32x32xf32>, i32 -> vector<32x32xf32>
    %cst_51 = arith.constant 0.000000e+00 : f32
    %84 = vector.broadcast %cst_51 : f32 to vector<32x32xf32>
    %85 = arith.select %82, %84, %83 : vector<32x32xi1>, vector<32x32xf32>
    %c2_52 = arith.constant 2 : index
    %c0_53 = arith.constant 0 : index
    %c0_54 = arith.constant 0 : index
    %c0_55 = arith.constant 0 : index
    %86 = vector.load %arg2[%c2_52, %c0_53, %c0_54, %c0_55] : memref<3x3x32x32xf32, #tpu.memory_space<vmem>>, vector<1x1x32x32xf32>
    %87 = vector.shape_cast %86 : vector<1x1x32x32xf32> to vector<32x32xf32>
    %cst_56 = arith.constant dense<0.000000e+00> : vector<32x32xf32>
    %88 = tpu.matmul %85, %87, %cst_56 {dimension_numbers = #tpu.dot_dimension_numbers<[1], [0], [0], [1], [0, 0, 1, 1], [], []>} : vector<32x32xf32>, vector<32x32xf32>, vector<32x32xf32> -> vector<32x32xf32>
    %c4_i32_57 = arith.constant 4 : i32
    %89 = vector.broadcast %c4_i32_57 : i32 to vector<32x32xi32>
    %90 = arith.cmpi slt, %18, %89 : vector<32x32xi32>
    %c4_i32_58 = arith.constant 4 : i32
    %91 = tpu.dynamic_rotate %78 by %c4_i32_58 dim 0 : vector<32x32xf32>, i32 -> vector<32x32xf32>
    %cst_59 = arith.constant 0.000000e+00 : f32
    %92 = vector.broadcast %cst_59 : f32 to vector<32x32xf32>
    %93 = arith.select %90, %92, %91 : vector<32x32xi1>, vector<32x32xf32>
    %c2_60 = arith.constant 2 : index
    %c1_61 = arith.constant 1 : index
    %c0_62 = arith.constant 0 : index
    %c0_63 = arith.constant 0 : index
    %94 = vector.load %arg2[%c2_60, %c1_61, %c0_62, %c0_63] : memref<3x3x32x32xf32, #tpu.memory_space<vmem>>, vector<1x1x32x32xf32>
    %95 = vector.shape_cast %94 : vector<1x1x32x32xf32> to vector<32x32xf32>
    %cst_64 = arith.constant dense<0.000000e+00> : vector<32x32xf32>
    %96 = tpu.matmul %93, %95, %cst_64 {dimension_numbers = #tpu.dot_dimension_numbers<[1], [0], [0], [1], [0, 0, 1, 1], [], []>} : vector<32x32xf32>, vector<32x32xf32>, vector<32x32xf32> -> vector<32x32xf32>
    %97 = arith.addf %88, %96 : vector<32x32xf32>
    %c2_65 = arith.constant 2 : index
    %c2_66 = arith.constant 2 : index
    %c0_67 = arith.constant 0 : index
    %c0_68 = arith.constant 0 : index
    %98 = vector.load %arg2[%c2_65, %c2_66, %c0_67, %c0_68] : memref<3x3x32x32xf32, #tpu.memory_space<vmem>>, vector<1x1x32x32xf32>
    %99 = vector.shape_cast %98 : vector<1x1x32x32xf32> to vector<32x32xf32>
    %cst_69 = arith.constant dense<0.000000e+00> : vector<32x32xf32>
    %100 = tpu.matmul %78, %99, %cst_69 {dimension_numbers = #tpu.dot_dimension_numbers<[1], [0], [0], [1], [0, 0, 1, 1], [], []>} : vector<32x32xf32>, vector<32x32xf32>, vector<32x32xf32> -> vector<32x32xf32>
    %101 = arith.addf %97, %100 : vector<32x32xf32>
    %c2_70 = arith.constant 2 : index
    %c0_71 = arith.constant 0 : index
    %c0_72 = arith.constant 0 : index
    %102 = vector.load %arg3[%c2_70, %c0_71, %c0_72] : memref<3x1x32xf32, #tpu.memory_space<vmem>>, vector<1x1x32xf32>
    %103 = vector.shape_cast %102 : vector<1x1x32xf32> to vector<1x32xf32>
    %104 = vector.broadcast %103 : vector<1x32xf32> to vector<32x32xf32>
    %105 = arith.addf %101, %104 : vector<32x32xf32>
    %cst_73 = arith.constant 0.000000e+00 : f32
    %106 = vector.broadcast %cst_73 : f32 to vector<32x32xf32>
    %107 = arith.maximumf %105, %106 : vector<32x32xf32>
    %108 = arith.addf %107, %78 : vector<32x32xf32>
    %109 = vector.shape_cast %108 : vector<32x32xf32> to vector<2x16x32xf32>
    %c0_74 = arith.constant 0 : index
    %c0_75 = arith.constant 0 : index
    %c0_76 = arith.constant 0 : index
    %110 = vector.load %arg4[%c0_74, %c0_75, %c0_76] : memref<2x16x32xf32, #tpu.memory_space<vmem>>, vector<2x16x32xf32>
    tpu.vector_store %arg4[%c0_74, %c0_75, %c0_76], %109 {strides = array<i32>} : memref<2x16x32xf32, #tpu.memory_space<vmem>>, vector<2x16x32xf32>,
    %111 = tpu.concatenate %19, %49, %79 in 0 : vector<2x32xf32>, vector<4x32xf32>, vector<8x32xf32> -> vector<14x32xf32>
    %112 = tpu.concatenate %20, %50, %80 in 0 : vector<2x32xf32>, vector<4x32xf32>, vector<8x32xf32> -> vector<14x32xf32>
    %113 = vector.shape_cast %111 : vector<14x32xf32> to vector<1x14x32xf32>
    %114 = vector.shape_cast %112 : vector<14x32xf32> to vector<1x14x32xf32>
    %115 = tpu.concatenate %113, %114 in 0 : vector<1x14x32xf32>, vector<1x14x32xf32> -> vector<2x14x32xf32>
    %c0_77 = arith.constant 0 : index
    %c0_78 = arith.constant 0 : index
    %c0_79 = arith.constant 0 : index
    %116 = vector.load %arg5[%c0_77, %c0_78, %c0_79] : memref<2x14x32xf32, #tpu.memory_space<vmem>>, vector<2x14x32xf32>
    tpu.vector_store %arg5[%c0_77, %c0_78, %c0_79], %115 {strides = array<i32>} : memref<2x14x32xf32, #tpu.memory_space<vmem>>, vector<2x14x32xf32>,
    return
  }
  func.func @transform_0(%arg0: i32) -> (i32, i32, i32) {
    %c0_i32 = arith.constant 0 : i32
    %c0_i32_0 = arith.constant 0 : i32
    %c0_i32_1 = arith.constant 0 : i32
    return %arg0, %c0_i32, %c0_i32_0 : i32, i32, i32
  }
  func.func @transform_1(%arg0: i32) -> (i32, i32, i32, i32) {
    %c0_i32 = arith.constant 0 : i32
    %c0_i32_0 = arith.constant 0 : i32
    %c0_i32_1 = arith.constant 0 : i32
    %c0_i32_2 = arith.constant 0 : i32
    %c0_i32_3 = arith.constant 0 : i32
    return %c0_i32, %c0_i32_0, %c0_i32_1, %c0_i32_2 : i32, i32, i32, i32
  }
  func.func @transform_2(%arg0: i32) -> (i32, i32, i32) {
    %c0_i32 = arith.constant 0 : i32
    %c0_i32_0 = arith.constant 0 : i32
    %c0_i32_1 = arith.constant 0 : i32
    %c0_i32_2 = arith.constant 0 : i32
    return %c0_i32, %c0_i32_0, %c0_i32_1 : i32, i32, i32
  }
  func.func @transform_3(%arg0: i32) -> (i32, i32, i32) {
    %c0_i32 = arith.constant 0 : i32
    %c0_i32_0 = arith.constant 0 : i32
    %c0_i32_1 = arith.constant 0 : i32
    return %arg0, %c0_i32, %c0_i32_0 : i32, i32, i32
  }
  func.func @transform_4(%arg0: i32) -> (i32, i32, i32) {
    %c0_i32 = arith.constant 0 : i32
    %c0_i32_0 = arith.constant 0 : i32
    %c0_i32_1 = arith.constant 0 : i32
    return %arg0, %c0_i32, %c0_i32_0 : i32, i32, i32
  }
}

</mosaic_0001>

<llo_original>
// kernel: tcn_forward.1
$region0: #{tcn_forward.1}
  #allocation0 [shape = 'u32[]', space=smem, size = 0x4, offset = 0x4, fixed_abs, tag = 'smem constant byte address 0x4 - core index']
  #allocation1 [shape = 'u32[144,128]{1,0:T(1,128)}', space=vmem, size = 0x12000, scoped, tag = 'internal scratch']
  %s0 = inlined_call_operand.vmem [shape: f32[2,16,32], index: 0, kind: input, shape index: {}]
  %s1 = inlined_call_operand.vmem [shape: f32[3,3,32,32], index: 1, kind: input, shape index: {}]
  %s2 = inlined_call_operand.vmem [shape: f32[3,1,32], index: 2, kind: input, shape index: {}]
  %s3 = inlined_call_operand.hbm [shape: f32[2,16,32], index: 3, kind: output, shape index: {0}]
  %s4 = inlined_call_operand.vmem [shape: f32[2,14,32], index: 4, kind: output, shape index: {1}]
  %5 = xla_tuple %s3, %s4
  %s6 = sld [smem:[#allocation0]]
  $region30: #{tcn_forward.1} parent=0
    _
  %s8 = ssub.s32 1, %s6
  %s9 = scalar_select 0, %s8, %s6
  $region1: #{tcn_forward.1} parent=0
    #allocation2 [shape = 'u8[16384]{0}', space=vmem, size = 0x4000, scoped, tag = 'output window, operand 0, single buffered']
    #allocation3 [shape = 's32[1]{0}', space=sflag, size = 0x4, scoped, tag = 'scoped memory for tcn_forward.1']
    %10 = vsyncpa [#allocation3], 0
    // Predicated region
    $region2: #{tcn_forward.1} parent=1 // pred_check
      _
    $region3: #{tcn_forward.1} parent=1 // pred_check_branch
      %12 = sbr.rel (0) target = $region5
    $region4: #{tcn_forward.1} parent=1 // pred_region
      _
    $region5: #{tcn_forward.1} parent=1 // pred_fallthru
      _
    // Predicated region
    $region6: #{tcn_forward.1} parent=1 // pred_check
      _
    $region7: #{tcn_forward.1} parent=1 // pred_check_branch
      %14 = sbr.rel (0) target = $region9
    $region8: #{tcn_forward.1} parent=1 // pred_region
      _
    $region9: #{tcn_forward.1} parent=1 // pred_fallthru
      _
    // Predicated region
    $region10: #{tcn_forward.1} parent=1 // pred_check
      _
    $region11: #{tcn_forward.1} parent=1 // pred_check_branch
      %16 = sbr.rel (0) target = $region13
    $region12: #{tcn_forward.1} parent=1 // pred_region
      _
    $region13: #{tcn_forward.1} parent=1 // pred_fallthru
      _
    %v17 = vld [vmem:[%s0] sm:$0xff]
    %v18 = vld [vmem:[%s0 + $0x8] sm:$0xff]
    %v19 = vld [vmem:[%s0 + $0x10] sm:$0xff]
    %v20 = vld [vmem:[%s0 + $0x18] sm:$0xff]
    %v21 = vlaneseq
    %v22 = vshrl.u32 %v21, 7
    %v23 = vadd.s32 %v22, 8
    %v24 = vadd.s32 %v22, 16
    %v25 = vadd.s32 %v22, 24
    %vm26 = vcmp.lt.s32.totalorder %v22, 0
    %v27 = vsub.s32 0, %v22
    %v28 = vsel %vm26, %v27, %v22
    %v29 = vshrl.u32 %v28, 4
    %v30 = vand.u32 %v28, 15
    %v31 = vsub.s32 0, %v30
    %v32 = vsel %vm26, %v31, %v30
    %vm33 = vcmp.lt.s32.totalorder %v23, 0
    %v34 = vsub.s32 0, %v23
    %v35 = vsel %vm33, %v34, %v23
    %v36 = vshrl.u32 %v35, 4
    %v37 = vand.u32 %v35, 15
    %v38 = vsub.s32 0, %v37
    %v39 = vsel %vm33, %v38, %v37
    %vm40 = vcmp.lt.s32.totalorder %v24, 0
    %v41 = vsub.s32 0, %v24
    %v42 = vsel %vm40, %v41, %v24
    %v43 = vshrl.u32 %v42, 4
    %v44 = vand.u32 %v42, 15
    %v45 = vsub.s32 0, %v44
    %v46 = vsel %vm40, %v45, %v44
    %vm47 = vcmp.lt.s32.totalorder %v25, 0
    %v48 = vsub.s32 0, %v25
    %v49 = vsel %vm47, %v48, %v25
    %v50 = vshrl.u32 %v49, 4
    %v51 = vand.u32 %v49, 15
    %v52 = vsub.s32 0, %v51
    %v53 = vsel %vm47, %v52, %v51
    %vm54 = vcmp.ne.s32.totalorder %v32, 0
    %vm55 = vcmp.ne.s32.totalorder %v39, 0
    %vm56 = vcmp.ne.s32.totalorder %v46, 0
    %vm57 = vcmp.ne.s32.totalorder %v53, 0
    %vm58 = vcmp.lt.s32.totalorder %v32, 0
    %vm59 = vcmp.lt.s32.totalorder %v39, 0
    %vm60 = vcmp.lt.s32.totalorder %v46, 0
    %vm61 = vcmp.lt.s32.totalorder %v53, 0
    %vm62 = vmand %vm58, %vm54
    %vm63 = vmand %vm59, %vm55
    %vm64 = vmand %vm60, %vm56
    %vm65 = vmand %vm61, %vm57
    %v66 = vadd.s32 %v32, 16
    %v67 = vadd.s32 %v39, 16
    %v68 = vadd.s32 %v46, 16
    %v69 = vadd.s32 %v53, 16
    %v70 = vsel %vm62, %v66, %v32
    %v71 = vsel %vm63, %v67, %v39
    %v72 = vsel %vm64, %v68, %v46
    %v73 = vsel %vm65, %v69, %v53
    %vm74 = vcmp.lt.s32.totalorder %v70, 2
    %vm75 = vcmp.lt.s32.totalorder %v71, 2
    %vm76 = vcmp.lt.s32.totalorder %v72, 2
    %vm77 = vcmp.lt.s32.totalorder %v73, 2
    %v78 = vrot.slane %v17, 6
    %v79 = vrot.slane %v18, 6
    %v80 = vrot.slane %v19, 6
    %v81 = vrot.slane %v20, 6
    %vm82 = vcmp.lt.s32.totalorder %v22, 2
    %v83 = vsel %vm82, %v80, %v81
    %v84 = vsel %vm82, %v79, %v80
    %v85 = vsel %vm82, %v78, %v79
    %v86 = vsel %vm82, %v81, %v78
    %v87 = vsel %vm74, 0.0, %v86
    %v88 = vsel %vm75, 0.0, %v85
    %v89 = vsel %vm76, 0.0, %v84
    %v90 = vsel %vm77, 0.0, %v83
    %v91 = vld [vmem:[%s1] sm:$0xff]
    %v92 = vld [vmem:[%s1 + $0x8] sm:$0xff]
    %v93 = vld [vmem:[%s1 + $0x10] sm:$0xff]
    %v94 = vld [vmem:[%s1 + $0x18] sm:$0xff]
    %vm95 = vcmp.lt.s32.totalorder %v70, 1
    %vm96 = vcmp.lt.s32.totalorder %v71, 1
    %vm97 = vcmp.lt.s32.totalorder %v72, 1
    %vm98 = vcmp.lt.s32.totalorder %v73, 1
    %v99 = vrot.slane %v17, 7
    %v100 = vrot.slane %v18, 7
    %v101 = vrot.slane %v19, 7
    %v102 = vrot.slane %v20, 7
    %vm103 = vcmp.lt.s32.totalorder %v22, 1
    %v104 = vsel %vm103, %v101, %v102
    %v105 = vsel %vm103, %v100, %v101
    %v106 = vsel %vm103, %v99, %v100
    %v107 = vsel %vm103, %v102, %v99
    %v108 = vsel %vm95, 0.0, %v107
    %v109 = vsel %vm96, 0.0, %v106
    %v110 = vsel %vm97, 0.0, %v105
    %v111 = vsel %vm98, 0.0, %v104
    %s112 = scalar_lea.vmem %s1, 32
    %v113 = vld [vmem:[%s112] sm:$0xff]
    %v114 = vld [vmem:[%s112 + $0x8] sm:$0xff]
    %v115 = vld [vmem:[%s112 + $0x10] sm:$0xff]
    %v116 = vld [vmem:[%s112 + $0x18] sm:$0xff]
    %vm117 = vcmask 261120
    %v119 = vsel %vm117, %v108, 0
    %v122 = vsel %vm117, %v109, 0
    %v125 = vsel %vm117, %v110, 0
    %v128 = vsel %vm117, %v111, 0
    %130 = vmatprep.subr.mxu0 0.0
    %131 = vmatpush1.msra.mxu0 %v113
    %132 = vmatprep.subr.mxu0 0.0
    %133 = vmatpush1.msra.mxu0 %v114
    %134 = vmatprep.subr.mxu0 0.0
    %135 = vmatpush1.msra.mxu0 %v115
    %136 = vmatprep.subr.mxu0 0.0
    %137 = vmatpush1.msra.mxu0 %v116
    %138 = vmatprep.subr.mxu0 0.0
    %139 = vmatpush1.msra.mxu0 0.0
    %140 = vmatprep.subr.mxu0 0.0
    %141 = vmatpush1.msra.mxu0 0.0
    %142 = vmatprep.subr.mxu0 0.0
    %143 = vmatpush1.msra.mxu0 0.0
    %144 = vmatprep.subr.mxu0 0.0
    %145 = vmatpush1.msra.mxu0 0.0
    %146 = vmatprep.subr.mxu0 0.0
    %147 = vmatpush1.msra.mxu0 0.0
    %148 = vmatprep.subr.mxu0 0.0
    %149 = vmatpush1.msra.mxu0 0.0
    %150 = vmatprep.subr.mxu0 0.0
    %151 = vmatpush1.msra.mxu0 0.0
    %152 = vmatprep.subr.mxu0 0.0
    %153 = vmatpush1.msra.mxu0 0.0
    %154 = vmatprep.subr.mxu0 0.0
    %155 = vmatpush1.msra.mxu0 0.0
    %156 = vmatprep.subr.mxu0 0.0
    %157 = vmatpush1.msra.mxu0 0.0
    %158 = vmatprep.subr.mxu0 0.0
    %159 = vmatpush1.msra.mxu0 0.0
    %160 = vmatprep.subr.mxu0 0.0
    %161 = vmatpush1.msra.mxu0 0.0
    %162 = vmatprep.subr.mxu0 0.0
    %163 = vmatpush1.msra.mxu0 0.0
    %164 = vmatprep.subr.mxu0 0.0
    %165 = vmatpush1.msra.mxu0 0.0
    %166 = vmatprep.subr.mxu0 0.0
    %167 = vmatpush1.msra.mxu0 0.0
    %168 = vmatprep.subr.mxu0 0.0
    %169 = vmatpush1.msra.mxu0 0.0
    %170 = vmatprep.subr.mxu0 0.0
    %171 = vmatpush1.msra.mxu0 0.0
    %172 = vmatprep.subr.mxu0 0.0
    %173 = vmatpush1.msra.mxu0 0.0
    %174 = vmatprep.subr.mxu0 0.0
    %175 = vmatpush1.msra.mxu0 0.0
    %176 = vmatprep.subr.mxu0 0.0
    %177 = vmatpush1.msra.mxu0 0.0
    %178 = vmatprep.subr.mxu0 0.0
    %179 = vmatpush1.msra.mxu0 0.0
    %180 = vmatprep.subr.mxu0 0.0
    %181 = vmatpush1.msra.mxu0 0.0
    %182 = vmatprep.subr.mxu0 0.0
    %183 = vmatpush1.msra.mxu0 0.0
    %184 = vmatprep.subr.mxu0 0.0
    %185 = vmatpush1.msra.mxu0 0.0
    %186 = vmatprep.subr.mxu0 0.0
    %187 = vmatpush1.msra.mxu0 0.0
    %188 = vmatprep.subr.mxu0 0.0
    %189 = vmatpush1.msra.mxu0 0.0
    %190 = vmatprep.subr.mxu0 0.0
    %191 = vmatpush1.msra.mxu0 0.0
    %192 = vmatprep.subr.mxu0 0.0
    %193 = vmatpush1.msra.mxu0 0.0
    %194 = vmatprep.mubr.f32.mxu0 0.0
    %195 = vmatmul.mubr.f32.gmra.mrb[0].mxu0 %v119
    %v196 = vpop.f32.mrb[0].mxu0
    %v197 = vadd.f32 0.0, %v196
    %v198 = vpop.f32.mrb[0].mxu0
    %199 = vmatprep.mubr.f32.mxu0 0.0
    %200 = vmatmul.mubr.f32.gmra.mrb[0].mxu0 %v122
    %v201 = vpop.f32.mrb[0].mxu0
    %v202 = vadd.f32 0.0, %v201
    %v203 = vpop.f32.mrb[0].mxu0
    %204 = vmatprep.mubr.f32.mxu0 0.0
    %205 = vmatmul.mubr.f32.gmra.mrb[0].mxu0 %v125
    %v206 = vpop.f32.mrb[0].mxu0
    %v207 = vadd.f32 0.0, %v206
    %v208 = vpop.f32.mrb[0].mxu0
    %209 = vmatprep.mubr.f32.mxu0 0.0
    %210 = vmatmul.mubr.f32.gmra.mrb[0].mxu0 %v128
    %v211 = vpop.f32.mrb[0].mxu0
    %v212 = vadd.f32 0.0, %v211
    %v213 = vpop.f32.mrb[0].mxu0
    %214 = vdwg.mxu0
    %v216 = vsel %vm117, %v87, 0
    %v219 = vsel %vm117, %v88, 0
    %v222 = vsel %vm117, %v89, 0
    %v225 = vsel %vm117, %v90, 0
    %227 = vmatprep.subr.mxu0 0.0
    %228 = vmatpush1.msra.mxu0 %v91
    %229 = vmatprep.subr.mxu0 0.0
    %230 = vmatpush1.msra.mxu0 %v92
    %231 = vmatprep.subr.mxu0 0.0
    %232 = vmatpush1.msra.mxu0 %v93
    %233 = vmatprep.subr.mxu0 0.0
    %234 = vmatpush1.msra.mxu0 %v94
    %235 = vmatprep.subr.mxu0 0.0
    %236 = vmatpush1.msra.mxu0 0.0
    %237 = vmatprep.subr.mxu0 0.0
    %238 = vmatpush1.msra.mxu0 0.0
    %239 = vmatprep.subr.mxu0 0.0
    %240 = vmatpush1.msra.mxu0 0.0
    %241 = vmatprep.subr.mxu0 0.0
    %242 = vmatpush1.msra.mxu0 0.0
    %243 = vmatprep.subr.mxu0 0.0
    %244 = vmatpush1.msra.mxu0 0.0
    %245 = vmatprep.subr.mxu0 0.0
    %246 = vmatpush1.msra.mxu0 0.0
    %247 = vmatprep.subr.mxu0 0.0
    %248 = vmatpush1.msra.mxu0 0.0
    %249 = vmatprep.subr.mxu0 0.0
    %250 = vmatpush1.msra.mxu0 0.0
    %251 = vmatprep.subr.mxu0 0.0
    %252 = vmatpush1.msra.mxu0 0.0
    %253 = vmatprep.subr.mxu0 0.0
    %254 = vmatpush1.msra.mxu0 0.0
    %255 = vmatprep.subr.mxu0 0.0
    %256 = vmatpush1.msra.mxu0 0.0
    %257 = vmatprep.subr.mxu0 0.0
    %258 = vmatpush1.msra.mxu0 0.0
    %259 = vmatprep.subr.mxu0 0.0
    %260 = vmatpush1.msra.mxu0 0.0
    %261 = vmatprep.subr.mxu0 0.0
    %262 = vmatpush1.msra.mxu0 0.0
    %263 = vmatprep.subr.mxu0 0.0
    %264 = vmatpush1.msra.mxu0 0.0
    %265 = vmatprep.subr.mxu0 0.0
    %266 = vmatpush1.msra.mxu0 0.0
    %267 = vmatprep.subr.mxu0 0.0
    %268 = vmatpush1.msra.mxu0 0.0
    %269 = vmatprep.subr.mxu0 0.0
    %270 = vmatpush1.msra.mxu0 0.0
    %271 = vmatprep.subr.mxu0 0.0
    %272 = vmatpush1.msra.mxu0 0.0
    %273 = vmatprep.subr.mxu0 0.0
    %274 = vmatpush1.msra.mxu0 0.0
    %275 = vmatprep.subr.mxu0 0.0
    %276 = vmatpush1.msra.mxu0 0.0
    %277 = vmatprep.subr.mxu0 0.0
    %278 = vmatpush1.msra.mxu0 0.0
    %279 = vmatprep.subr.mxu0 0.0
    %280 = vmatpush1.msra.mxu0 0.0
    %281 = vmatprep.subr.mxu0 0.0
    %282 = vmatpush1.msra.mxu0 0.0
    %283 = vmatprep.subr.mxu0 0.0
    %284 = vmatpush1.msra.mxu0 0.0
    %285 = vmatprep.subr.mxu0 0.0
    %286 = vmatpush1.msra.mxu0 0.0
    %287 = vmatprep.subr.mxu0 0.0
    %288 = vmatpush1.msra.mxu0 0.0
    %289 = vmatprep.subr.mxu0 0.0
    %290 = vmatpush1.msra.mxu0 0.0
    %291 = vmatprep.mubr.f32.mxu0 0.0
    %292 = vmatmul.mubr.f32.gmra.mrb[0].mxu0 %v216
    %v293 = vpop.f32.mrb[0].mxu0
    %v294 = vadd.f32 %v197, %v293
    %v295 = vpop.f32.mrb[0].mxu0
    %296 = vmatprep.mubr.f32.mxu0 0.0
    %297 = vmatmul.mubr.f32.gmra.mrb[0].mxu0 %v219
    %v298 = vpop.f32.mrb[0].mxu0
    %v299 = vadd.f32 %v202, %v298
    %v300 = vpop.f32.mrb[0].mxu0
    %301 = vmatprep.mubr.f32.mxu0 0.0
    %302 = vmatmul.mubr.f32.gmra.mrb[0].mxu0 %v222
    %v303 = vpop.f32.mrb[0].mxu0
    %v304 = vadd.f32 %v207, %v303
    %v305 = vpop.f32.mrb[0].mxu0
    %306 = vmatprep.mubr.f32.mxu0 0.0
    %307 = vmatmul.mubr.f32.gmra.mrb[0].mxu0 %v225
    %v308 = vpop.f32.mrb[0].mxu0
    %v309 = vadd.f32 %v212, %v308
    %v310 = vpop.f32.mrb[0].mxu0
    %311 = vdwg.mxu0
    %s312 = scalar_lea.vmem %s1, 64
    %v313 = vld [vmem:[%s312] sm:$0xff]
    %v314 = vld [vmem:[%s312 + $0x8] sm:$0xff]
    %v315 = vld [vmem:[%s312 + $0x10] sm:$0xff]
    %v316 = vld [vmem:[%s312 + $0x18] sm:$0xff]
    %v318 = vsel %vm117, %v17, 0
    %v321 = vsel %vm117, %v18, 0
    %v324 = vsel %vm117, %v19, 0
    %v327 = vsel %vm117, %v20, 0
    %329 = vmatprep.subr.mxu0 0.0
    %330 = vmatpush1.msra.mxu0 %v313
    %331 = vmatprep.subr.mxu0 0.0
    %332 = vmatpush1.msra.mxu0 %v314
    %333 = vmatprep.subr.mxu0 0.0
    %334 = vmatpush1.msra.mxu0 %v315
    %335 = vmatprep.subr.mxu0 0.0
    %336 = vmatpush1.msra.mxu0 %v316
    %337 = vmatprep.subr.mxu0 0.0
    %338 = vmatpush1.msra.mxu0 0.0
    %339 = vmatprep.subr.mxu0 0.0
    %340 = vmatpush1.msra.mxu0 0.0
    %341 = vmatprep.subr.mxu0 0.0
    %342 = vmatpush1.msra.mxu0 0.0
    %343 = vmatprep.subr.mxu0 0.0
    %344 = vmatpush1.msra.mxu0 0.0
    %345 = vmatprep.subr.mxu0 0.0
    %346 = vmatpush1.msra.mxu0 0.0
    %347 = vmatprep.subr.mxu0 0.0
    %348 = vmatpush1.msra.mxu0 0.0
    %349 = vmatprep.subr.mxu0 0.0
    %350 = vmatpush1.msra.mxu0 0.0
    %351 = vmatprep.subr.mxu0 0.0
    %352 = vmatpush1.msra.mxu0 0.0
    %353 = vmatprep.subr.mxu0 0.0
    %354 = vmatpush1.msra.mxu0 0.0
    %355 = vmatprep.subr.mxu0 0.0
    %356 = vmatpush1.msra.mxu0 0.0
    %357 = vmatprep.subr.mxu0 0.0
    %358 = vmatpush1.msra.mxu0 0.0
    %359 = vmatprep.subr.mxu0 0.0
    %360 = vmatpush1.msra.mxu0 0.0
    %361 = vmatprep.subr.mxu0 0.0
    %362 = vmatpush1.msra.mxu0 0.0
    %363 = vmatprep.subr.mxu0 0.0
    %364 = vmatpush1.msra.mxu0 0.0
    %365 = vmatprep.subr.mxu0 0.0
    %366 = vmatpush1.msra.mxu0 0.0
    %367 = vmatprep.subr.mxu0 0.0
    %368 = vmatpush1.msra.mxu0 0.0
    %369 = vmatprep.subr.mxu0 0.0
    %370 = vmatpush1.msra.mxu0 0.0
    %371 = vmatprep.subr.mxu0 0.0
    %372 = vmatpush1.msra.mxu0 0.0
    %373 = vmatprep.subr.mxu0 0.0
    %374 = vmatpush1.msra.mxu0 0.0
    %375 = vmatprep.subr.mxu0 0.0
    %376 = vmatpush1.msra.mxu0 0.0
    %377 = vmatprep.subr.mxu0 0.0
    %378 = vmatpush1.msra.mxu0 0.0
    %379 = vmatprep.subr.mxu0 0.0
    %380 = vmatpush1.msra.mxu0 0.0
    %381 = vmatprep.subr.mxu0 0.0
    %382 = vmatpush1.msra.mxu0 0.0
    %383 = vmatprep.subr.mxu0 0.0
    %384 = vmatpush1.msra.mxu0 0.0
    %385 = vmatprep.subr.mxu0 0.0
    %386 = vmatpush1.msra.mxu0 0.0
    %387 = vmatprep.subr.mxu0 0.0
    %388 = vmatpush1.msra.mxu0 0.0
    %389 = vmatprep.subr.mxu0 0.0
    %390 = vmatpush1.msra.mxu0 0.0
    %391 = vmatprep.subr.mxu0 0.0
    %392 = vmatpush1.msra.mxu0 0.0
    %393 = vmatprep.mubr.f32.mxu0 0.0
    %394 = vmatmul.mubr.f32.gmra.mrb[0].mxu0 %v318
    %v395 = vpop.f32.mrb[0].mxu0
    %v396 = vadd.f32 0.0, %v395
    %v397 = vpop.f32.mrb[0].mxu0
    %398 = vmatprep.mubr.f32.mxu0 0.0
    %399 = vmatmul.mubr.f32.gmra.mrb[0].mxu0 %v321
    %v400 = vpop.f32.mrb[0].mxu0
    %v401 = vadd.f32 0.0, %v400
    %v402 = vpop.f32.mrb[0].mxu0
    %403 = vmatprep.mubr.f32.mxu0 0.0
    %404 = vmatmul.mubr.f32.gmra.mrb[0].mxu0 %v324
    %v405 = vpop.f32.mrb[0].mxu0
    %v406 = vadd.f32 0.0, %v405
    %v407 = vpop.f32.mrb[0].mxu0
    %408 = vmatprep.mubr.f32.mxu0 0.0
    %409 = vmatmul.mubr.f32.gmra.mrb[0].mxu0 %v327
    %v410 = vpop.f32.mrb[0].mxu0
    %v411 = vadd.f32 0.0, %v410
    %v412 = vpop.f32.mrb[0].mxu0
    %413 = vdwg.mxu0
    %v414 = vadd.f32 %v294, %v396
    %v415 = vadd.f32 %v299, %v401
    %v416 = vadd.f32 %v304, %v406
    %v417 = vadd.f32 %v309, %v411
    %v418 = vld [vmem:[%s2] sm:$0x1]
    %v420 = vlaneseq
    %v421 = vshrl.u32 %v420, 7
    %v422 = vsub.s32 0, %v421
    %v423 = vrot.slane %v418, %v422
    %v425 = vadd.f32 %v414, %v423
    %v426 = vadd.f32 %v415, %v423
    %v427 = vadd.f32 %v416, %v423
    %v428 = vadd.f32 %v417, %v423
    %v429 = vmax.f32 %v425, 0.0
    %v430 = vmax.f32 %v426, 0.0
    %v431 = vmax.f32 %v427, 0.0
    %v432 = vmax.f32 %v428, 0.0
    %v433 = vadd.f32 %v429, %v17
    %v434 = vadd.f32 %v430, %v18
    %v435 = vadd.f32 %v431, %v19
    %v436 = vadd.f32 %v432, %v20
    %vm437 = vcmp.lt.s32.totalorder %v70, 4
    %vm438 = vcmp.lt.s32.totalorder %v71, 4
    %vm439 = vcmp.lt.s32.totalorder %v72, 4
    %vm440 = vcmp.lt.s32.totalorder %v73, 4
    %v441 = vrot.slane %v433, 4
    %v442 = vrot.slane %v434, 4
    %v443 = vrot.slane %v435, 4
    %v444 = vrot.slane %v436, 4
    %vm445 = vcmp.lt.s32.totalorder %v22, 4
    %v446 = vsel %vm445, %v443, %v444
    %v447 = vsel %vm445, %v442, %v443
    %v448 = vsel %vm445, %v441, %v442
    %v449 = vsel %vm445, %v444, %v441
    %v450 = vsel %vm437, 0.0, %v449
    %v451 = vsel %vm438, 0.0, %v448
    %v452 = vsel %vm439, 0.0, %v447
    %v453 = vsel %vm440, 0.0, %v446
    %s454 = scalar_lea.vmem %s1, 96
    %v455 = vld [vmem:[%s454] sm:$0xff]
    %v456 = vld [vmem:[%s454 + $0x8] sm:$0xff]
    %v457 = vld [vmem:[%s454 + $0x10] sm:$0xff]
    %v458 = vld [vmem:[%s454 + $0x18] sm:$0xff]
    %v459 = vrot.slane %v433, 6
    %v460 = vrot.slane %v434, 6
    %v461 = vrot.slane %v435, 6
    %v462 = vrot.slane %v436, 6
    %v463 = vsel %vm82, %v461, %v462
    %v464 = vsel %vm82, %v460, %v461
    %v465 = vsel %vm82, %v459, %v460
    %v466 = vsel %vm82, %v462, %v459
    %v467 = vsel %vm74, 0.0, %v466
    %v468 = vsel %vm75, 0.0, %v465
    %v469 = vsel %vm76, 0.0, %v464
    %v470 = vsel %vm77, 0.0, %v463
    %s471 = scalar_lea.vmem %s1, 128
    %v472 = vld [vmem:[%s471] sm:$0xff]
    %v473 = vld [vmem:[%s471 + $0x8] sm:$0xff]
    %v474 = vld [vmem:[%s471 + $0x10] sm:$0xff]
    %v475 = vld [vmem:[%s471 + $0x18] sm:$0xff]
    %v477 = vsel %vm117, %v467, 0
    %v480 = vsel %vm117, %v468, 0
    %v483 = vsel %vm117, %v469, 0
    %v486 = vsel %vm117, %v470, 0
    %488 = vmatprep.subr.mxu0 0.0
    %489 = vmatpush1.msra.mxu0 %v472
    %490 = vmatprep.subr.mxu0 0.0
    %491 = vmatpush1.msra.mxu0 %v473
    %492 = vmatprep.subr.mxu0 0.0
    %493 = vmatpush1.msra.mxu0 %v474
    %494 = vmatprep.subr.mxu0 0.0
    %495 = vmatpush1.msra.mxu0 %v475
    %496 = vmatprep.subr.mxu0 0.0
    %497 = vmatpush1.msra.mxu0 0.0
    %498 = vmatprep.subr.mxu0 0.0
    %499 = vmatpush1.msra.mxu0 0.0
    %500 = vmatprep.subr.mxu0 0.0
    %501 = vmatpush1.msra.mxu0 0.0
    %502 = vmatprep.subr.mxu0 0.0
    %503 = vmatpush1.msra.mxu0 0.0
    %504 = vmatprep.subr.mxu0 0.0
    %505 = vmatpush1.msra.mxu0 0.0
    %506 = vmatprep.subr.mxu0 0.0
    %507 = vmatpush1.msra.mxu0 0.0
    %508 = vmatprep.subr.mxu0 0.0
    %509 = vmatpush1.msra.mxu0 0.0
    %510 = vmatprep.subr.mxu0 0.0
    %511 = vmatpush1.msra.mxu0 0.0
    %512 = vmatprep.subr.mxu0 0.0
    %513 = vmatpush1.msra.mxu0 0.0
    %514 = vmatprep.subr.mxu0 0.0
    %515 = vmatpush1.msra.mxu0 0.0
    %516 = vmatprep.subr.mxu0 0.0
    %517 = vmatpush1.msra.mxu0 0.0
    %518 = vmatprep.subr.mxu0 0.0
    %519 = vmatpush1.msra.mxu0 0.0
    %520 = vmatprep.subr.mxu0 0.0
    %521 = vmatpush1.msra.mxu0 0.0
    %522 = vmatprep.subr.mxu0 0.0
    %523 = vmatpush1.msra.mxu0 0.0
    %524 = vmatprep.subr.mxu0 0.0
    %525 = vmatpush1.msra.mxu0 0.0
    %526 = vmatprep.subr.mxu0 0.0
    %527 = vmatpush1.msra.mxu0 0.0
    %528 = vmatprep.subr.mxu0 0.0
    %529 = vmatpush1.msra.mxu0 0.0
    %530 = vmatprep.subr.mxu0 0.0
    %531 = vmatpush1.msra.mxu0 0.0
    %532 = vmatprep.subr.mxu0 0.0
    %533 = vmatpush1.msra.mxu0 0.0
    %534 = vmatprep.subr.mxu0 0.0
    %535 = vmatpush1.msra.mxu0 0.0
    %536 = vmatprep.subr.mxu0 0.0
    %537 = vmatpush1.msra.mxu0 0.0
    %538 = vmatprep.subr.mxu0 0.0
    %539 = vmatpush1.msra.mxu0 0.0
    %540 = vmatprep.subr.mxu0 0.0
    %541 = vmatpush1.msra.mxu0 0.0
    %542 = vmatprep.subr.mxu0 0.0
    %543 = vmatpush1.msra.mxu0 0.0
    %544 = vmatprep.subr.mxu0 0.0
    %545 = vmatpush1.msra.mxu0 0.0
    %546 = vmatprep.subr.mxu0 0.0
    %547 = vmatpush1.msra.mxu0 0.0
    %548 = vmatprep.subr.mxu0 0.0
    %549 = vmatpush1.msra.mxu0 0.0
    %550 = vmatprep.subr.mxu0 0.0
    %551 = vmatpush1.msra.mxu0 0.0
    %552 = vmatprep.mubr.f32.mxu0 0.0
    %553 = vmatmul.mubr.f32.gmra.mrb[0].mxu0 %v477
    %v554 = vpop.f32.mrb[0].mxu0
    %v555 = vadd.f32 0.0, %v554
    %v556 = vpop.f32.mrb[0].mxu0
    %557 = vmatprep.mubr.f32.mxu0 0.0
    %558 = vmatmul.mubr.f32.gmra.mrb[0].mxu0 %v480
    %v559 = vpop.f32.mrb[0].mxu0
    %v560 = vadd.f32 0.0, %v559
    %v561 = vpop.f32.mrb[0].mxu0
    %562 = vmatprep.mubr.f32.mxu0 0.0
    %563 = vmatmul.mubr.f32.gmra.mrb[0].mxu0 %v483
    %v564 = vpop.f32.mrb[0].mxu0
    %v565 = vadd.f32 0.0, %v564
    %v566 = vpop.f32.mrb[0].mxu0
    %567 = vmatprep.mubr.f32.mxu0 0.0
    %568 = vmatmul.mubr.f32.gmra.mrb[0].mxu0 %v486
    %v569 = vpop.f32.mrb[0].mxu0
    %v570 = vadd.f32 0.0, %v569
    %v571 = vpop.f32.mrb[0].mxu0
    %572 = vdwg.mxu0
    %v574 = vsel %vm117, %v450, 0
    %v577 = vsel %vm117, %v451, 0
    %v580 = vsel %vm117, %v452, 0
    %v583 = vsel %vm117, %v453, 0
    %585 = vmatprep.subr.mxu0 0.0
    %586 = vmatpush1.msra.mxu0 %v455
    %587 = vmatprep.subr.mxu0 0.0
    %588 = vmatpush1.msra.mxu0 %v456
    %589 = vmatprep.subr.mxu0 0.0
    %590 = vmatpush1.msra.mxu0 %v457
    %591 = vmatprep.subr.mxu0 0.0
    %592 = vmatpush1.msra.mxu0 %v458
    %593 = vmatprep.subr.mxu0 0.0
    %594 = vmatpush1.msra.mxu0 0.0
    %595 = vmatprep.subr.mxu0 0.0
    %596 = vmatpush1.msra.mxu0 0.0
    %597 = vmatprep.subr.mxu0 0.0
    %598 = vmatpush1.msra.mxu0 0.0
    %599 = vmatprep.subr.mxu0 0.0
    %600 = vmatpush1.msra.mxu0 0.0
    %601 = vmatprep.subr.mxu0 0.0
    %602 = vmatpush1.msra.mxu0 0.0
    %603 = vmatprep.subr.mxu0 0.0
    %604 = vmatpush1.msra.mxu0 0.0
    %605 = vmatprep.subr.mxu0 0.0
    %606 = vmatpush1.msra.mxu0 0.0
    %607 = vmatprep.subr.mxu0 0.0
    %608 = vmatpush1.msra.mxu0 0.0
    %609 = vmatprep.subr.mxu0 0.0
    %610 = vmatpush1.msra.mxu0 0.0
    %611 = vmatprep.subr.mxu0 0.0
    %612 = vmatpush1.msra.mxu0 0.0
    %613 = vmatprep.subr.mxu0 0.0
    %614 = vmatpush1.msra.mxu0 0.0
    %615 = vmatprep.subr.mxu0 0.0
    %616 = vmatpush1.msra.mxu0 0.0
    %617 = vmatprep.subr.mxu0 0.0
    %618 = vmatpush1.msra.mxu0 0.0
    %619 = vmatprep.subr.mxu0 0.0
    %620 = vmatpush1.msra.mxu0 0.0
    %621 = vmatprep.subr.mxu0 0.0
    %622 = vmatpush1.msra.mxu0 0.0
    %623 = vmatprep.subr.mxu0 0.0
    %624 = vmatpush1.msra.mxu0 0.0
    %625 = vmatprep.subr.mxu0 0.0
    %626 = vmatpush1.msra.mxu0 0.0
    %627 = vmatprep.subr.mxu0 0.0
    %628 = vmatpush1.msra.mxu0 0.0
    %629 = vmatprep.subr.mxu0 0.0
    %630 = vmatpush1.msra.mxu0 0.0
    %631 = vmatprep.subr.mxu0 0.0
    %632 = vmatpush1.msra.mxu0 0.0
    %633 = vmatprep.subr.mxu0 0.0
    %634 = vmatpush1.msra.mxu0 0.0
    %635 = vmatprep.subr.mxu0 0.0
    %636 = vmatpush1.msra.mxu0 0.0
    %637 = vmatprep.subr.mxu0 0.0
    %638 = vmatpush1.msra.mxu0 0.0
    %639 = vmatprep.subr.mxu0 0.0
    %640 = vmatpush1.msra.mxu0 0.0
    %641 = vmatprep.subr.mxu0 0.0
    %642 = vmatpush1.msra.mxu0 0.0
    %643 = vmatprep.subr.mxu0 0.0
    %644 = vmatpush1.msra.mxu0 0.0
    %645 = vmatprep.subr.mxu0 0.0
    %646 = vmatpush1.msra.mxu0 0.0
    %647 = vmatprep.subr.mxu0 0.0
    %648 = vmatpush1.msra.mxu0 0.0
    %649 = vmatprep.mubr.f32.mxu0 0.0
    %650 = vmatmul.mubr.f32.gmra.mrb[0].mxu0 %v574
    %v651 = vpop.f32.mrb[0].mxu0
    %v652 = vadd.f32 %v555, %v651
    %v653 = vpop.f32.mrb[0].mxu0
    %654 = vmatprep.mubr.f32.mxu0 0.0
    %655 = vmatmul.mubr.f32.gmra.mrb[0].mxu0 %v577
    %v656 = vpop.f32.mrb[0].mxu0
    %v657 = vadd.f32 %v560, %v656
    %v658 = vpop.f32.mrb[0].mxu0
    %659 = vmatprep.mubr.f32.mxu0 0.0
    %660 = vmatmul.mubr.f32.gmra.mrb[0].mxu0 %v580
    %v661 = vpop.f32.mrb[0].mxu0
    %v662 = vadd.f32 %v565, %v661
    %v663 = vpop.f32.mrb[0].mxu0
    %664 = vmatprep.mubr.f32.mxu0 0.0
    %665 = vmatmul.mubr.f32.gmra.mrb[0].mxu0 %v583
    %v666 = vpop.f32.mrb[0].mxu0
    %v667 = vadd.f32 %v570, %v666
    %v668 = vpop.f32.mrb[0].mxu0
    %669 = vdwg.mxu0
    %s670 = scalar_lea.vmem %s1, 160
    %v671 = vld [vmem:[%s670] sm:$0xff]
    %v672 = vld [vmem:[%s670 + $0x8] sm:$0xff]
    %v673 = vld [vmem:[%s670 + $0x10] sm:$0xff]
    %v674 = vld [vmem:[%s670 + $0x18] sm:$0xff]
    %v676 = vsel %vm117, %v433, 0
    %v679 = vsel %vm117, %v434, 0
    %v682 = vsel %vm117, %v435, 0
    %v685 = vsel %vm117, %v436, 0
    %687 = vmatprep.subr.mxu0 0.0
    %688 = vmatpush1.msra.mxu0 %v671
    %689 = vmatprep.subr.mxu0 0.0
    %690 = vmatpush1.msra.mxu0 %v672
    %691 = vmatprep.subr.mxu0 0.0
    %692 = vmatpush1.msra.mxu0 %v673
    %693 = vmatprep.subr.mxu0 0.0
    %694 = vmatpush1.msra.mxu0 %v674
    %695 = vmatprep.subr.mxu0 0.0
    %696 = vmatpush1.msra.mxu0 0.0
    %697 = vmatprep.subr.mxu0 0.0
    %698 = vmatpush1.msra.mxu0 0.0
    %699 = vmatprep.subr.mxu0 0.0
    %700 = vmatpush1.msra.mxu0 0.0
    %701 = vmatprep.subr.mxu0 0.0
    %702 = vmatpush1.msra.mxu0 0.0
    %703 = vmatprep.subr.mxu0 0.0
    %704 = vmatpush1.msra.mxu0 0.0
    %705 = vmatprep.subr.mxu0 0.0
    %706 = vmatpush1.msra.mxu0 0.0
    %707 = vmatprep.subr.mxu0 0.0
    %708 = vmatpush1.msra.mxu0 0.0
    %709 = vmatprep.subr.mxu0 0.0
    %710 = vmatpush1.msra.mxu0 0.0
    %711 = vmatprep.subr.mxu0 0.0
    %712 = vmatpush1.msra.mxu0 0.0
    %713 = vmatprep.subr.mxu0 0.0
    %714 = vmatpush1.msra.mxu0 0.0
    %715 = vmatprep.subr.mxu0 0.0
    %716 = vmatpush1.msra.mxu0 0.0
    %717 = vmatprep.subr.mxu0 0.0
    %718 = vmatpush1.msra.mxu0 0.0
    %719 = vmatprep.subr.mxu0 0.0
    %720 = vmatpush1.msra.mxu0 0.0
    %721 = vmatprep.subr.mxu0 0.0
    %722 = vmatpush1.msra.mxu0 0.0
    %723 = vmatprep.subr.mxu0 0.0
    %724 = vmatpush1.msra.mxu0 0.0
    %725 = vmatprep.subr.mxu0 0.0
    %726 = vmatpush1.msra.mxu0 0.0
    %727 = vmatprep.subr.mxu0 0.0
    %728 = vmatpush1.msra.mxu0 0.0
    %729 = vmatprep.subr.mxu0 0.0
    %730 = vmatpush1.msra.mxu0 0.0
    %731 = vmatprep.subr.mxu0 0.0
    %732 = vmatpush1.msra.mxu0 0.0
    %733 = vmatprep.subr.mxu0 0.0
    %734 = vmatpush1.msra.mxu0 0.0
    %735 = vmatprep.subr.mxu0 0.0
    %736 = vmatpush1.msra.mxu0 0.0
    %737 = vmatprep.subr.mxu0 0.0
    %738 = vmatpush1.msra.mxu0 0.0
    %739 = vmatprep.subr.mxu0 0.0
    %740 = vmatpush1.msra.mxu0 0.0
    %741 = vmatprep.subr.mxu0 0.0
    %742 = vmatpush1.msra.mxu0 0.0
    %743 = vmatprep.subr.mxu0 0.0
    %744 = vmatpush1.msra.mxu0 0.0
    %745 = vmatprep.subr.mxu0 0.0
    %746 = vmatpush1.msra.mxu0 0.0
    %747 = vmatprep.subr.mxu0 0.0
    %748 = vmatpush1.msra.mxu0 0.0
    %749 = vmatprep.subr.mxu0 0.0
    %750 = vmatpush1.msra.mxu0 0.0
    %751 = vmatprep.mubr.f32.mxu0 0.0
    %752 = vmatmul.mubr.f32.gmra.mrb[0].mxu0 %v676
    %v753 = vpop.f32.mrb[0].mxu0
    %v754 = vadd.f32 0.0, %v753
    %v755 = vpop.f32.mrb[0].mxu0
    %756 = vmatprep.mubr.f32.mxu0 0.0
    %757 = vmatmul.mubr.f32.gmra.mrb[0].mxu0 %v679
    %v758 = vpop.f32.mrb[0].mxu0
    %v759 = vadd.f32 0.0, %v758
    %v760 = vpop.f32.mrb[0].mxu0
    %761 = vmatprep.mubr.f32.mxu0 0.0
    %762 = vmatmul.mubr.f32.gmra.mrb[0].mxu0 %v682
    %v763 = vpop.f32.mrb[0].mxu0
    %v764 = vadd.f32 0.0, %v763
    %v765 = vpop.f32.mrb[0].mxu0
    %766 = vmatprep.mubr.f32.mxu0 0.0
    %767 = vmatmul.mubr.f32.gmra.mrb[0].mxu0 %v685
    %v768 = vpop.f32.mrb[0].mxu0
    %v769 = vadd.f32 0.0, %v768
    %v770 = vpop.f32.mrb[0].mxu0
    %771 = vdwg.mxu0
    %v772 = vadd.f32 %v652, %v754
    %v773 = vadd.f32 %v657, %v759
    %v774 = vadd.f32 %v662, %v764
    %v775 = vadd.f32 %v667, %v769
    %s776 = scalar_lea.vmem %s2, 1
    %v777 = vld [vmem:[%s776] sm:$0x1]
    %v779 = vlaneseq
    %v780 = vshrl.u32 %v779, 7
    %v781 = vsub.s32 0, %v780
    %v782 = vrot.slane %v777, %v781
    %v784 = vadd.f32 %v772, %v782
    %v785 = vadd.f32 %v773, %v782
    %v786 = vadd.f32 %v774, %v782
    %v787 = vadd.f32 %v775, %v782
    %v788 = vmax.f32 %v784, 0.0
    %v789 = vmax.f32 %v785, 0.0
    %v790 = vmax.f32 %v786, 0.0
    %v791 = vmax.f32 %v787, 0.0
    %v792 = vadd.f32 %v788, %v433
    %v793 = vadd.f32 %v789, %v434
    %v794 = vadd.f32 %v790, %v435
    %v795 = vadd.f32 %v791, %v436
    %vm796 = vcmp.lt.s32.totalorder %v70, 8
    %vm797 = vcmp.lt.s32.totalorder %v71, 8
    %vm798 = vcmp.lt.s32.totalorder %v72, 8
    %vm799 = vcmp.lt.s32.totalorder %v73, 8
    %v800 = vsel %vm796, 0.0, %v795
    %v801 = vsel %vm797, 0.0, %v792
    %v802 = vsel %vm798, 0.0, %v793
    %v803 = vsel %vm799, 0.0, %v794
    %s804 = scalar_lea.vmem %s1, 192
    %v805 = vld [vmem:[%s804] sm:$0xff]
    %v806 = vld [vmem:[%s804 + $0x8] sm:$0xff]
    %v807 = vld [vmem:[%s804 + $0x10] sm:$0xff]
    %v808 = vld [vmem:[%s804 + $0x18] sm:$0xff]
    %v809 = vrot.slane %v792, 4
    %v810 = vrot.slane %v793, 4
    %v811 = vrot.slane %v794, 4
    %v812 = vrot.slane %v795, 4
    %v813 = vsel %vm445, %v811, %v812
    %v814 = vsel %vm445, %v810, %v811
    %v815 = vsel %vm445, %v809, %v810
    %v816 = vsel %vm445, %v812, %v809
    %v817 = vsel %vm437, 0.0, %v816
    %v818 = vsel %vm438, 0.0, %v815
    %v819 = vsel %vm439, 0.0, %v814
    %v820 = vsel %vm440, 0.0, %v813
    %s821 = scalar_lea.vmem %s1, 224
    %v822 = vld [vmem:[%s821] sm:$0xff]
    %v823 = vld [vmem:[%s821 + $0x8] sm:$0xff]
    %v824 = vld [vmem:[%s821 + $0x10] sm:$0xff]
    %v825 = vld [vmem:[%s821 + $0x18] sm:$0xff]
    %v827 = vsel %vm117, %v817, 0
    %v830 = vsel %vm117, %v818, 0
    %v833 = vsel %vm117, %v819, 0
    %v836 = vsel %vm117, %v820, 0
    %838 = vmatprep.subr.mxu0 0.0
    %839 = vmatpush1.msra.mxu0 %v822
    %840 = vmatprep.subr.mxu0 0.0
    %841 = vmatpush1.msra.mxu0 %v823
    %842 = vmatprep.subr.mxu0 0.0
    %843 = vmatpush1.msra.mxu0 %v824
    %844 = vmatprep.subr.mxu0 0.0
    %845 = vmatpush1.msra.mxu0 %v825
    %846 = vmatprep.subr.mxu0 0.0
    %847 = vmatpush1.msra.mxu0 0.0
    %848 = vmatprep.subr.mxu0 0.0
    %849 = vmatpush1.msra.mxu0 0.0
    %850 = vmatprep.subr.mxu0 0.0
    %851 = vmatpush1.msra.mxu0 0.0
    %852 = vmatprep.subr.mxu0 0.0
    %853 = vmatpush1.msra.mxu0 0.0
    %854 = vmatprep.subr.mxu0 0.0
    %855 = vmatpush1.msra.mxu0 0.0
    %856 = vmatprep.subr.mxu0 0.0
    %857 = vmatpush1.msra.mxu0 0.0
    %858 = vmatprep.subr.mxu0 0.0
    %859 = vmatpush1.msra.mxu0 0.0
    %860 = vmatprep.subr.mxu0 0.0
    %861 = vmatpush1.msra.mxu0 0.0
    %862 = vmatprep.subr.mxu0 0.0
    %863 = vmatpush1.msra.mxu0 0.0
    %864 = vmatprep.subr.mxu0 0.0
    %865 = vmatpush1.msra.mxu0 0.0
    %866 = vmatprep.subr.mxu0 0.0
    %867 = vmatpush1.msra.mxu0 0.0
    %868 = vmatprep.subr.mxu0 0.0
    %869 = vmatpush1.msra.mxu0 0.0
    %870 = vmatprep.subr.mxu0 0.0
    %871 = vmatpush1.msra.mxu0 0.0
    %872 = vmatprep.subr.mxu0 0.0
    %873 = vmatpush1.msra.mxu0 0.0
    %874 = vmatprep.subr.mxu0 0.0
    %875 = vmatpush1.msra.mxu0 0.0
    %876 = vmatprep.subr.mxu0 0.0
    %877 = vmatpush1.msra.mxu0 0.0
    %878 = vmatprep.subr.mxu0 0.0
    %879 = vmatpush1.msra.mxu0 0.0
    %880 = vmatprep.subr.mxu0 0.0
    %881 = vmatpush1.msra.mxu0 0.0
    %882 = vmatprep.subr.mxu0 0.0
    %883 = vmatpush1.msra.mxu0 0.0
    %884 = vmatprep.subr.mxu0 0.0
    %885 = vmatpush1.msra.mxu0 0.0
    %886 = vmatprep.subr.mxu0 0.0
    %887 = vmatpush1.msra.mxu0 0.0
    %888 = vmatprep.subr.mxu0 0.0
    %889 = vmatpush1.msra.mxu0 0.0
    %890 = vmatprep.subr.mxu0 0.0
    %891 = vmatpush1.msra.mxu0 0.0
    %892 = vmatprep.subr.mxu0 0.0
    %893 = vmatpush1.msra.mxu0 0.0
    %894 = vmatprep.subr.mxu0 0.0
    %895 = vmatpush1.msra.mxu0 0.0
    %896 = vmatprep.subr.mxu0 0.0
    %897 = vmatpush1.msra.mxu0 0.0
    %898 = vmatprep.subr.mxu0 0.0
    %899 = vmatpush1.msra.mxu0 0.0
    %900 = vmatprep.subr.mxu0 0.0
    %901 = vmatpush1.msra.mxu0 0.0
    %902 = vmatprep.mubr.f32.mxu0 0.0
    %903 = vmatmul.mubr.f32.gmra.mrb[0].mxu0 %v827
    %v904 = vpop.f32.mrb[0].mxu0
    %v905 = vadd.f32 0.0, %v904
    %v906 = vpop.f32.mrb[0].mxu0
    %907 = vmatprep.mubr.f32.mxu0 0.0
    %908 = vmatmul.mubr.f32.gmra.mrb[0].mxu0 %v830
    %v909 = vpop.f32.mrb[0].mxu0
    %v910 = vadd.f32 0.0, %v909
    %v911 = vpop.f32.mrb[0].mxu0
    %912 = vmatprep.mubr.f32.mxu0 0.0
    %913 = vmatmul.mubr.f32.gmra.mrb[0].mxu0 %v833
    %v914 = vpop.f32.mrb[0].mxu0
    %v915 = vadd.f32 0.0, %v914
    %v916 = vpop.f32.mrb[0].mxu0
    %917 = vmatprep.mubr.f32.mxu0 0.0
    %918 = vmatmul.mubr.f32.gmra.mrb[0].mxu0 %v836
    %v919 = vpop.f32.mrb[0].mxu0
    %v920 = vadd.f32 0.0, %v919
    %v921 = vpop.f32.mrb[0].mxu0
    %922 = vdwg.mxu0
    %v924 = vsel %vm117, %v800, 0
    %v927 = vsel %vm117, %v801, 0
    %v930 = vsel %vm117, %v802, 0
    %v933 = vsel %vm117, %v803, 0
    %935 = vmatprep.subr.mxu0 0.0
    %936 = vmatpush1.msra.mxu0 %v805
    %937 = vmatprep.subr.mxu0 0.0
    %938 = vmatpush1.msra.mxu0 %v806
    %939 = vmatprep.subr.mxu0 0.0
    %940 = vmatpush1.msra.mxu0 %v807
    %941 = vmatprep.subr.mxu0 0.0
    %942 = vmatpush1.msra.mxu0 %v808
    %943 = vmatprep.subr.mxu0 0.0
    %944 = vmatpush1.msra.mxu0 0.0
    %945 = vmatprep.subr.mxu0 0.0
    %946 = vmatpush1.msra.mxu0 0.0
    %947 = vmatprep.subr.mxu0 0.0
    %948 = vmatpush1.msra.mxu0 0.0
    %949 = vmatprep.subr.mxu0 0.0
    %950 = vmatpush1.msra.mxu0 0.0
    %951 = vmatprep.subr.mxu0 0.0
    %952 = vmatpush1.msra.mxu0 0.0
    %953 = vmatprep.subr.mxu0 0.0
    %954 = vmatpush1.msra.mxu0 0.0
    %955 = vmatprep.subr.mxu0 0.0
    %956 = vmatpush1.msra.mxu0 0.0
    %957 = vmatprep.subr.mxu0 0.0
    %958 = vmatpush1.msra.mxu0 0.0
    %959 = vmatprep.subr.mxu0 0.0
    %960 = vmatpush1.msra.mxu0 0.0
    %961 = vmatprep.subr.mxu0 0.0
    %962 = vmatpush1.msra.mxu0 0.0
    %963 = vmatprep.subr.mxu0 0.0
    %964 = vmatpush1.msra.mxu0 0.0
    %965 = vmatprep.subr.mxu0 0.0
    %966 = vmatpush1.msra.mxu0 0.0
    %967 = vmatprep.subr.mxu0 0.0
    %968 = vmatpush1.msra.mxu0 0.0
    %969 = vmatprep.subr.mxu0 0.0
    %970 = vmatpush1.msra.mxu0 0.0
    %971 = vmatprep.subr.mxu0 0.0
    %972 = vmatpush1.msra.mxu0 0.0
    %973 = vmatprep.subr.mxu0 0.0
    %974 = vmatpush1.msra.mxu0 0.0
    %975 = vmatprep.subr.mxu0 0.0
    %976 = vmatpush1.msra.mxu0 0.0
    %977 = vmatprep.subr.mxu0 0.0
    %978 = vmatpush1.msra.mxu0 0.0
    %979 = vmatprep.subr.mxu0 0.0
    %980 = vmatpush1.msra.mxu0 0.0
    %981 = vmatprep.subr.mxu0 0.0
    %982 = vmatpush1.msra.mxu0 0.0
    %983 = vmatprep.subr.mxu0 0.0
    %984 = vmatpush1.msra.mxu0 0.0
    %985 = vmatprep.subr.mxu0 0.0
    %986 = vmatpush1.msra.mxu0 0.0
    %987 = vmatprep.subr.mxu0 0.0
    %988 = vmatpush1.msra.mxu0 0.0
    %989 = vmatprep.subr.mxu0 0.0
    %990 = vmatpush1.msra.mxu0 0.0
    %991 = vmatprep.subr.mxu0 0.0
    %992 = vmatpush1.msra.mxu0 0.0
    %993 = vmatprep.subr.mxu0 0.0
    %994 = vmatpush1.msra.mxu0 0.0
    %995 = vmatprep.subr.mxu0 0.0
    %996 = vmatpush1.msra.mxu0 0.0
    %997 = vmatprep.subr.mxu0 0.0
    %998 = vmatpush1.msra.mxu0 0.0
    %999 = vmatprep.mubr.f32.mxu0 0.0
    %1000 = vmatmul.mubr.f32.gmra.mrb[0].mxu0 %v924
    %v1001 = vpop.f32.mrb[0].mxu0
    %v1002 = vadd.f32 %v905, %v1001
    %v1003 = vpop.f32.mrb[0].mxu0
    %1004 = vmatprep.mubr.f32.mxu0 0.0
    %1005 = vmatmul.mubr.f32.gmra.mrb[0].mxu0 %v927
    %v1006 = vpop.f32.mrb[0].mxu0
    %v1007 = vadd.f32 %v910, %v1006
    %v1008 = vpop.f32.mrb[0].mxu0
    %1009 = vmatprep.mubr.f32.mxu0 0.0
    %1010 = vmatmul.mubr.f32.gmra.mrb[0].mxu0 %v930
    %v1011 = vpop.f32.mrb[0].mxu0
    %v1012 = vadd.f32 %v915, %v1011
    %v1013 = vpop.f32.mrb[0].mxu0
    %1014 = vmatprep.mubr.f32.mxu0 0.0
    %1015 = vmatmul.mubr.f32.gmra.mrb[0].mxu0 %v933
    %v1016 = vpop.f32.mrb[0].mxu0
    %v1017 = vadd.f32 %v920, %v1016
    %v1018 = vpop.f32.mrb[0].mxu0
    %1019 = vdwg.mxu0
    %s1020 = scalar_lea.vmem %s1, 256
    %v1021 = vld [vmem:[%s1020] sm:$0xff]
    %v1022 = vld [vmem:[%s1020 + $0x8] sm:$0xff]
    %v1023 = vld [vmem:[%s1020 + $0x10] sm:$0xff]
    %v1024 = vld [vmem:[%s1020 + $0x18] sm:$0xff]
    %v1026 = vsel %vm117, %v792, 0
    %v1029 = vsel %vm117, %v793, 0
    %v1032 = vsel %vm117, %v794, 0
    %v1035 = vsel %vm117, %v795, 0
    %1037 = vmatprep.subr.mxu0 0.0
    %1038 = vmatpush1.msra.mxu0 %v1021
    %1039 = vmatprep.subr.mxu0 0.0
    %1040 = vmatpush1.msra.mxu0 %v1022
    %1041 = vmatprep.subr.mxu0 0.0
    %1042 = vmatpush1.msra.mxu0 %v1023
    %1043 = vmatprep.subr.mxu0 0.0
    %1044 = vmatpush1.msra.mxu0 %v1024
    %1045 = vmatprep.subr.mxu0 0.0
    %1046 = vmatpush1.msra.mxu0 0.0
    %1047 = vmatprep.subr.mxu0 0.0
    %1048 = vmatpush1.msra.mxu0 0.0
    %1049 = vmatprep.subr.mxu0 0.0
    %1050 = vmatpush1.msra.mxu0 0.0
    %1051 = vmatprep.subr.mxu0 0.0
    %1052 = vmatpush1.msra.mxu0 0.0
    %1053 = vmatprep.subr.mxu0 0.0
    %1054 = vmatpush1.msra.mxu0 0.0
    %1055 = vmatprep.subr.mxu0 0.0
    %1056 = vmatpush1.msra.mxu0 0.0
    %1057 = vmatprep.subr.mxu0 0.0
    %1058 = vmatpush1.msra.mxu0 0.0
    %1059 = vmatprep.subr.mxu0 0.0
    %1060 = vmatpush1.msra.mxu0 0.0
    %1061 = vmatprep.subr.mxu0 0.0
    %1062 = vmatpush1.msra.mxu0 0.0
    %1063 = vmatprep.subr.mxu0 0.0
    %1064 = vmatpush1.msra.mxu0 0.0
    %1065 = vmatprep.subr.mxu0 0.0
    %1066 = vmatpush1.msra.mxu0 0.0
    %1067 = vmatprep.subr.mxu0 0.0
    %1068 = vmatpush1.msra.mxu0 0.0
    %1069 = vmatprep.subr.mxu0 0.0
    %1070 = vmatpush1.msra.mxu0 0.0
    %1071 = vmatprep.subr.mxu0 0.0
    %1072 = vmatpush1.msra.mxu0 0.0
    %1073 = vmatprep.subr.mxu0 0.0
    %1074 = vmatpush1.msra.mxu0 0.0
    %1075 = vmatprep.subr.mxu0 0.0
    %1076 = vmatpush1.msra.mxu0 0.0
    %1077 = vmatprep.subr.mxu0 0.0
    %1078 = vmatpush1.msra.mxu0 0.0
    %1079 = vmatprep.subr.mxu0 0.0
    %1080 = vmatpush1.msra.mxu0 0.0
    %1081 = vmatprep.subr.mxu0 0.0
    %1082 = vmatpush1.msra.mxu0 0.0
    %1083 = vmatprep.subr.mxu0 0.0
    %1084 = vmatpush1.msra.mxu0 0.0
    %1085 = vmatprep.subr.mxu0 0.0
    %1086 = vmatpush1.msra.mxu0 0.0
    %1087 = vmatprep.subr.mxu0 0.0
    %1088 = vmatpush1.msra.mxu0 0.0
    %1089 = vmatprep.subr.mxu0 0.0
    %1090 = vmatpush1.msra.mxu0 0.0
    %1091 = vmatprep.subr.mxu0 0.0
    %1092 = vmatpush1.msra.mxu0 0.0
    %1093 = vmatprep.subr.mxu0 0.0
    %1094 = vmatpush1.msra.mxu0 0.0
    %1095 = vmatprep.subr.mxu0 0.0
    %1096 = vmatpush1.msra.mxu0 0.0
    %1097 = vmatprep.subr.mxu0 0.0
    %1098 = vmatpush1.msra.mxu0 0.0
    %1099 = vmatprep.subr.mxu0 0.0
    %1100 = vmatpush1.msra.mxu0 0.0
    %1101 = vmatprep.mubr.f32.mxu0 0.0
    %1102 = vmatmul.mubr.f32.gmra.mrb[0].mxu0 %v1026
    %v1103 = vpop.f32.mrb[0].mxu0
    %v1104 = vadd.f32 0.0, %v1103
    %v1105 = vpop.f32.mrb[0].mxu0
    %1106 = vmatprep.mubr.f32.mxu0 0.0
    %1107 = vmatmul.mubr.f32.gmra.mrb[0].mxu0 %v1029
    %v1108 = vpop.f32.mrb[0].mxu0
    %v1109 = vadd.f32 0.0, %v1108
    %v1110 = vpop.f32.mrb[0].mxu0
    %1111 = vmatprep.mubr.f32.mxu0 0.0
    %1112 = vmatmul.mubr.f32.gmra.mrb[0].mxu0 %v1032
    %v1113 = vpop.f32.mrb[0].mxu0
    %v1114 = vadd.f32 0.0, %v1113
    %v1115 = vpop.f32.mrb[0].mxu0
    %1116 = vmatprep.mubr.f32.mxu0 0.0
    %1117 = vmatmul.mubr.f32.gmra.mrb[0].mxu0 %v1035
    %v1118 = vpop.f32.mrb[0].mxu0
    %v1119 = vadd.f32 0.0, %v1118
    %v1120 = vpop.f32.mrb[0].mxu0
    %1121 = vdwg.mxu0
    %v1122 = vadd.f32 %v1002, %v1104
    %v1123 = vadd.f32 %v1007, %v1109
    %v1124 = vadd.f32 %v1012, %v1114
    %v1125 = vadd.f32 %v1017, %v1119
    %s1126 = scalar_lea.vmem %s2, 2
    %v1127 = vld [vmem:[%s1126] sm:$0x1]
    %v1129 = vlaneseq
    %v1130 = vshrl.u32 %v1129, 7
    %v1131 = vsub.s32 0, %v1130
    %v1132 = vrot.slane %v1127, %v1131
    %v1134 = vadd.f32 %v1122, %v1132
    %v1135 = vadd.f32 %v1123, %v1132
    %v1136 = vadd.f32 %v1124, %v1132
    %v1137 = vadd.f32 %v1125, %v1132
    %v1138 = vmax.f32 %v1134, 0.0
    %v1139 = vmax.f32 %v1135, 0.0
    %v1140 = vmax.f32 %v1136, 0.0
    %v1141 = vmax.f32 %v1137, 0.0
    %v1142 = vadd.f32 %v1138, %v792
    %v1143 = vadd.f32 %v1139, %v793
    %v1144 = vadd.f32 %v1140, %v794
    %v1145 = vadd.f32 %v1141, %v795
    %1146 = vst.msk [vmem:[#allocation2] sm:$0xff] %vm117, %v1142
    %1147 = vst.msk [vmem:[#allocation2 + $0x8] sm:$0xff] %vm117, %v1143
    %1148 = vst.msk [vmem:[#allocation2 + $0x10] sm:$0xff] %vm117, %v1144
    %1149 = vst.msk [vmem:[#allocation2 + $0x18] sm:$0xff] %vm117, %v1145
    %v1150 = vrot.slane %v18, 6
    %v1152 = vrot.slane %v434, 2
    %v1154 = vrot.slane %v793, 2
    %vm1156 = vcmask 1041408
    %v1157 = vsel %vm1156, %v1150, %v1152
    %vm1158 = vcmask 1045504
    %v1159 = vsel %vm1158, %v1157, %v1154
    %v1160 = vrot.slane %v20, 6
    %v1162 = vrot.slane %v436, 2
    %v1164 = vrot.slane %v795, 2
    %v1166 = vsel %vm1156, %v1160, %v1162
    %v1167 = vsel %vm1158, %v1166, %v1164
    %1168 = vst.msk [vmem:[%s4] sm:$0xff] %vm117, %v1159
    %vm1169 = vcmask 259072
    %1170 = vst.msk [vmem:[%s4 + $0x8] sm:$0x3f] %vm1169, %v1154
    %1171 = vst.msk [vmem:[%s4 + $0x10] sm:$0xff] %vm117, %v1167
    %1172 = vst.msk [vmem:[%s4 + $0x18] sm:$0x3f] %vm1169, %v1164
    // Predicated region
    $region14: #{tcn_forward.1} parent=1 // pred_check
      _
    $region15: #{tcn_forward.1} parent=1 // pred_check_branch
      %1174 = sbr.rel (0) target = $region17
    $region16: #{tcn_forward.1} parent=1 // pred_region
      %s1176 = ssub.s32 512, 512
      %1177 = vsyncadd [#allocation3], %s1176
      %s1178 = sshll.u32 [#allocation2], 4
      %s1179 = int_to_ptr.vmem [resolvable:$true] %s1178
      %1184 = dma.vmem_to_hbm [thread:$0]  %s1179, 512, %s3, [#allocation3], 128, 128, 8
    $region17: #{tcn_forward.1} parent=1 // pred_fallthru
      _
    // Predicated region
    $region18: #{tcn_forward.1} parent=1 // pred_check
      _
    $region19: #{tcn_forward.1} parent=1 // pred_check_branch
      %1186 = sbr.rel (0) target = $region21
    $region20: #{tcn_forward.1} parent=1 // pred_region
      _
    $region21: #{tcn_forward.1} parent=1 // pred_fallthru
      _
    // Predicated region
    $region22: #{tcn_forward.1} parent=1 // pred_check
      _
    $region23: #{tcn_forward.1} parent=1 // pred_check_branch
      %1188 = sbr.rel (0) target = $region25
    $region24: #{tcn_forward.1} parent=1 // pred_region
      %1189 = dma.done [#allocation3], 512
    $region25: #{tcn_forward.1} parent=1 // pred_fallthru
      _
    // Predicated region
    $region26: #{tcn_forward.1} parent=1 // pred_check
      _
    $region27: #{tcn_forward.1} parent=1 // pred_check_branch
      %1191 = sbr.rel (0) target = $region29
    $region28: #{tcn_forward.1} parent=1 // pred_region
      _
    $region29: #{tcn_forward.1} parent=1 // pred_fallthru
      _
    %1192 = vsyncpa [#allocation3], 1

</llo_original>
